<compile_context>
chip_gen: v6e
topology: v6e:2x2x1
jax: 0.10.0
libtpu: 0.0.40
codegen_flags: <defaults>
</compile_context>

<pallas_src>
import math

import jax
import jax.numpy as jnp
from jax import lax
from jax.experimental import pallas as pl
from jax.experimental.pallas import tpu as pltpu


def _round_up(n, m):
    return ((n + m - 1) // m) * m


def _modrelu(z, b_mod):
    """sign(z) * relu(|z| + b), matching the PyTorch reference (sign(0) == 0)."""
    mag = jnp.maximum(jnp.abs(z) + b_mod, 0.0)
    signed = jnp.where(z < 0.0, -mag, mag)
    return jnp.where(z == 0.0, 0.0, signed)


def _choose_row_tiling(rows, block_rows, *, min_tiles=1):
    """Sublane-aligned row tiling with at most a few rows of padding.

    Returns (padded_rows, tile_rows, num_tiles) with padded_rows = tile_rows*num_tiles.
    """
    rp = _round_up(max(rows, 8), 8)
    block_rows = _round_up(max(block_rows, 8), 8)
    nt = max(pl.cdiv(rp, block_rows), min_tiles)
    nt = min(nt, rp // 8)                       # never fewer than 8 rows per tile
    tr = _round_up(pl.cdiv(rp, nt), 8)
    nt = pl.cdiv(rp, tr)
    return nt * tr, tr, nt


def _compiler_params(dim_semantics, vmem_estimate_bytes):
    """Raise the scoped-VMEM limit only when the estimated footprint needs it."""
    kwargs = dict(dimension_semantics=dim_semantics)
    if vmem_estimate_bytes > 12 * 1024 * 1024:          # v5e default scope is 16 MiB
        kwargs["vmem_limit_bytes"] = min(
            max(int(vmem_estimate_bytes * 1.5) + (2 << 20), 32 << 20), 112 << 20)
    return pltpu.CompilerParams(**kwargs)


# ---------------------------------------------------------------------------
# One-time parameter preparation (hoisted out of the per-step path).
# ---------------------------------------------------------------------------
def prepare_params(w_in, b_in, w_rec, b_mod, *, compute_dtype=jnp.float32):
    """w_in: (H, I), b_in: (H,), w_rec: (H, H), b_mod: (H,).

    Produces pre-transposed, lane-padded parameters:
      w_in_t  : (Ip, Hp)    w_rec_t : (Hp, Hp)    (compute_dtype)
      b_in, b_mod : (1, Hp) f32 rows
    Zero padding keeps padded output columns exactly zero through modrelu.
    """
    H, I = w_in.shape
    assert w_rec.shape == (H, H)
    assert b_in.shape == (H,) and b_mod.shape == (H,)

    Ip = _round_up(I, 128)
    Hp = _round_up(H, 128)

    w_in_t = jnp.pad(w_in.T, ((0, Ip - I), (0, Hp - H))).astype(compute_dtype)
    w_rec_t = jnp.pad(w_rec.T, ((0, Hp - H), (0, Hp - H))).astype(compute_dtype)
    b_in_row = jnp.pad(b_in.reshape(1, H), ((0, 0), (0, Hp - H))).astype(jnp.float32)
    b_mod_row = jnp.pad(b_mod.reshape(1, H), ((0, 0), (0, Hp - H))).astype(jnp.float32)

    return {
        "input_size": I, "hidden_size": H, "compute_dtype": compute_dtype,
        "w_in_t": w_in_t, "w_rec_t": w_rec_t, "b_in": b_in_row, "b_mod": b_mod_row,
    }


# ---------------------------------------------------------------------------
# Single-step kernel (matches ExpRNNCell.forward): two dots, no wrapper concat.
# ---------------------------------------------------------------------------
def _step_kernel(x_ref, h_ref, w_in_ref, w_rec_ref, b_in_ref, b_mod_ref, out_ref):
    z = jnp.dot(x_ref[...], w_in_ref[...], preferred_element_type=jnp.float32)
    z = z + jnp.dot(h_ref[...], w_rec_ref[...], preferred_element_type=jnp.float32)
    z = z + b_in_ref[...]                                  # (1, Hp) broadcast
    out_ref[...] = _modrelu(z, b_mod_ref[...]).astype(out_ref.dtype)


def exprnn_cell(x, h, params, *, block_b=512):
    """x: (B, I), h: (B, H) -> (B, H). block_b: cap at 256 on v5e if VMEM-tight."""
    I, H = params["input_size"], params["hidden_size"]
    w_in_t, w_rec_t = params["w_in_t"], params["w_rec_t"]
    b_in, b_mod = params["b_in"], params["b_mod"]
    Ip, Hp = w_in_t.shape
    cdt = params["compute_dtype"]
    B = x.shape[0]
    assert x.shape == (B, I) and h.shape == (B, H)

    Bp, TB, nb = _choose_row_tiling(B, block_b)

    x_p = x.astype(cdt)
    h_p = h.astype(cdt)
    if (Bp, Ip) != (B, I):
        x_p = jnp.pad(x_p, ((0, Bp - B), (0, Ip - I)))
    if (Bp, Hp) != (B, H):
        h_p = jnp.pad(h_p, ((0, Bp - B), (0, Hp - H)))
    # NOTE: padded batch rows produce z = b_in -> nonzero garbage; rows are
    # independent and sliced away below.

    cit = jnp.dtype(cdt).itemsize
    vmem_est = (2 * TB * (Ip + Hp) * cit              # double-buffered x / h tiles
                + 2 * TB * Hp * jnp.dtype(x.dtype).itemsize   # output tiles
                + (Ip + Hp) * Hp * cit + 4 * Hp * 4)  # resident weights + biases

    out = pl.pallas_call(
        _step_kernel,
        out_shape=jax.ShapeDtypeStruct((Bp, Hp), x.dtype),
        grid=(nb,),
        in_specs=[
            pl.BlockSpec((TB, Ip), lambda i: (i, 0)),   # x batch tile
            pl.BlockSpec((TB, Hp), lambda i: (i, 0)),   # h batch tile
            pl.BlockSpec((Ip, Hp), lambda i: (0, 0)),   # W_in.T, resident
            pl.BlockSpec((Hp, Hp), lambda i: (0, 0)),   # W_rec.T, resident
            pl.BlockSpec((1, Hp), lambda i: (0, 0)),
            pl.BlockSpec((1, Hp), lambda i: (0, 0)),
        ],
        out_specs=pl.BlockSpec((TB, Hp), lambda i: (i, 0)),     # lane-dense stores
        compiler_params=_compiler_params(("parallel",), vmem_est),
    )(x_p, h_p, w_in_t, w_rec_t, b_in, b_mod)

    if (Bp, Hp) != (B, H):
        out = out[:B, :H]
    return out


# ---------------------------------------------------------------------------
# Hoisted input projection: one big parallel GEMM over all timesteps.
# ---------------------------------------------------------------------------
def _input_proj_kernel(x_ref, w_ref, b_ref, out_ref):
    z = jnp.dot(x_ref[...], w_ref[...], preferred_element_type=jnp.float32)
    out_ref[...] = (z + b_ref[...]).astype(out_ref.dtype)


def _input_projection(x2d, w_in_t, b_in, out_dtype, *, block_rows=512):
    """x2d: (R, Ip) -> (R, Hp) = x2d @ W_in.T + b_in (fully parallel GEMM)."""
    R, Ip = x2d.shape
    Hp = w_in_t.shape[1]
    Rp, TR, nr = _choose_row_tiling(R, block_rows)
    x_p = jnp.pad(x2d, ((0, Rp - R), (0, 0))) if Rp != R else x2d

    cit = jnp.dtype(x2d.dtype).itemsize
    vmem_est = (2 * TR * Ip * cit + 2 * TR * Hp * jnp.dtype(out_dtype).itemsize
                + Ip * Hp * cit + 2 * Hp * 4)

    out = pl.pallas_call(
        _input_proj_kernel,
        out_shape=jax.ShapeDtypeStruct((Rp, Hp), out_dtype),
        grid=(nr,),
        in_specs=[
            pl.BlockSpec((TR, Ip), lambda i: (i, 0)),
            pl.BlockSpec((Ip, Hp), lambda i: (0, 0)),
            pl.BlockSpec((1, Hp), lambda i: (0, 0)),
        ],
        out_specs=pl.BlockSpec((TR, Hp), lambda i: (i, 0)),
        compiler_params=_compiler_params(("parallel",), vmem_est),
    )(x_p, w_in_t, b_in)
    return out[:R] if Rp != R else out


# ---------------------------------------------------------------------------
# Whole-sequence kernel: W_rec resident in VMEM, T blocked, h carried in vregs
# within a block and in a VMEM scratch across blocks.
# ---------------------------------------------------------------------------
def _sequence_kernel(xw_ref, h0_ref, w_rec_ref, b_mod_ref, out_ref, h_scratch):
    @pl.when(pl.program_id(1) == 0)
    def _():
        h_scratch[...] = h0_ref[...].astype(jnp.float32)

    w_rec = w_rec_ref[...]
    b_mod = b_mod_ref[...]
    t_blk = xw_ref.shape[0]

    def step(t, h):
        # h stays in vregs across the unrolled block; only the block boundary
        # touches h_scratch (one vld + one vst per t_blk steps).
        z = xw_ref[t].astype(jnp.float32) + jnp.dot(
            h.astype(w_rec.dtype), w_rec, preferred_element_type=jnp.float32)
        h_new = _modrelu(z, b_mod)
        out_ref[t] = h_new.astype(out_ref.dtype)
        return h_new

    h_scratch[...] = lax.fori_loop(0, t_blk, step, h_scratch[...], unroll=True)


def exprnn_sequence(xs, h0, params, *, block_b=512, t_block=8, min_batch_tiles=1,
                    out_dtype=None):
    """xs: (T, B, I), h0: (B, H) -> all hidden states (T, B, H).

    min_batch_tiles=2 recommended on v7x (shards the 'parallel' batch axis over
    both TensorCores); block_b=256 recommended on v5e if VMEM-tight.
    """
    I, H = params["input_size"], params["hidden_size"]
    w_in_t, w_rec_t = params["w_in_t"], params["w_rec_t"]
    b_in, b_mod = params["b_in"], params["b_mod"]
    Ip, Hp = w_in_t.shape
    cdt = params["compute_dtype"]
    T, B, _ = xs.shape
    assert xs.shape == (T, B, I) and h0.shape == (B, H)
    if out_dtype is None:
        out_dtype = xs.dtype

    Bp, TB, nb = _choose_row_tiling(B, block_b, min_tiles=min_batch_tiles)
    T_blk = max(1, min(t_block, T))
    Tp = _round_up(T, T_blk)
    ntb = Tp // T_blk

    xs_p = xs.astype(cdt)
    if (Bp, Ip) != (B, I):
        xs_p = jnp.pad(xs_p, ((0, 0), (0, Bp - B), (0, Ip - I)))
    h0_p = h0.astype(cdt)
    if (Bp, Hp) != (B, H):
        h0_p = jnp.pad(h0_p, ((0, Bp - B), (0, Hp - H)))
    # NOTE: padded batch rows / padded trailing timesteps carry garbage hidden
    # states; rows and steps are independent and are sliced away below.

    # (1) Input projection off the serial critical path: one big GEMM.
    xw = _input_projection(xs_p.reshape(T * Bp, Ip), w_in_t, b_in, cdt)
    xw = xw.reshape(T, Bp, Hp)
    if Tp != T:
        xw = jnp.pad(xw, ((0, Tp - T), (0, 0), (0, 0)))

    cit = jnp.dtype(cdt).itemsize
    oit = jnp.dtype(out_dtype).itemsize
    vmem_est = (2 * T_blk * TB * Hp * (cit + oit)     # double-buffered xw / out tiles
                + 2 * TB * Hp * cit                    # h0 tile
                + 2 * Hp * Hp * cit                    # resident W_rec (2x worst case)
                + TB * Hp * 4 + 4 * Hp * 4)            # h_scratch + biases

    out = pl.pallas_call(
        _sequence_kernel,
        out_shape=jax.ShapeDtypeStruct((Tp, Bp, Hp), out_dtype),
        grid=(nb, ntb),                                # T innermost -> sequential
        in_specs=[
            pl.BlockSpec((T_blk, TB, Hp), lambda b, t: (t, b, 0)),   # xw time-block
            pl.BlockSpec((TB, Hp), lambda b, t: (b, 0)),             # h0 (read at t==0)
            pl.BlockSpec((Hp, Hp), lambda b, t: (0, 0)),             # W_rec resident
            pl.BlockSpec((1, Hp), lambda b, t: (0, 0)),              # b_mod resident
        ],
        out_specs=pl.BlockSpec((T_blk, TB, Hp), lambda b, t: (t, b, 0)),
        scratch_shapes=[pltpu.VMEM((TB, Hp), jnp.float32)],          # hidden carry
        compiler_params=_compiler_params(("parallel", "arbitrary"), vmem_est),
    )(xw, h0_p, w_rec_t, b_mod)

    if (Tp, Bp, Hp) != (T, B, H):
        out = out[:T, :B, :H]
    return out


# ---------------------------------------------------------------------------
# Pure-JAX references.
# ---------------------------------------------------------------------------
def reference_step(x, h, w_in, b_in, w_rec, b_mod):
    z = x @ w_in.T + b_in + h @ w_rec.T
    return jnp.sign(z) * jnp.maximum(jnp.abs(z) + b_mod, 0.0)


def reference_sequence(xs, h0, w_in, b_in, w_rec, b_mod):
    def step(h, x):
        h_new = reference_step(x, h, w_in, b_in, w_rec, b_mod)
        return h_new, h_new
    _, ys = jax.lax.scan(step, h0, xs)
    return ys


if __name__ == "__main__":
    batch = 8
    input_size = 16
    hidden_size = 32
    seq_len = 6

    key = jax.random.PRNGKey(0)
    k_x, k_xs, k_h, k_win, k_bin, k_theta, k_bmod = jax.random.split(key, 7)

    x = jax.random.normal(k_x, (batch, input_size), dtype=jnp.float32)
    xs = jax.random.normal(k_xs, (seq_len, batch, input_size), dtype=jnp.float32)
    h = jax.random.normal(k_h, (batch, hidden_size), dtype=jnp.float32)

    # input_kernel: Linear(input_size, hidden_size) with bias, kaiming_normal_.
    std = math.sqrt(2.0 / input_size)
    w_in = std * jax.random.normal(k_win, (hidden_size, input_size), dtype=jnp.float32)
    bound = 1.0 / math.sqrt(input_size)
    b_in = jax.random.uniform(k_bin, (hidden_size,), minval=-bound, maxval=bound,
                              dtype=jnp.float32)

    # recurrent_kernel: Linear(hidden, hidden) no bias, orthogonal-constrained.
    # TODO(synk): geotorch orthogonal parametrization + torus_init_ not ported;
    # use a deterministic Cayley-transform orthogonal matrix as a stand-in.
    a = jax.random.normal(k_theta, (hidden_size, hidden_size), dtype=jnp.float32) * 0.1
    skew = a - a.T
    eye = jnp.eye(hidden_size, dtype=jnp.float32)
    w_rec = jnp.linalg.solve(eye + skew, eye - skew)

    # modrelu bias: uniform(-0.01, 0.01).
    b_mod = jax.random.uniform(k_bmod, (hidden_size,), minval=-0.01, maxval=0.01,
                               dtype=jnp.float32)

    # --- f32 path: tight check against the reference ---
    params_f32 = prepare_params(w_in, b_in, w_rec, b_mod, compute_dtype=jnp.float32)

    out = jax.block_until_ready(exprnn_cell(x, h, params_f32))
    ref = reference_step(x, h, w_in, b_in, w_rec, b_mod)
    assert out.shape == (batch, hidden_size)
    assert jnp.allclose(out, ref, atol=1e-4, rtol=1e-4), "single-step mismatch"

    seq_out = jax.block_until_ready(exprnn_sequence(xs, h, params_f32))
    seq_ref = reference_sequence(xs, h, w_in, b_in, w_rec, b_mod)
    assert seq_out.shape == (seq_len, batch, hidden_size)
    assert jnp.allclose(seq_out, seq_ref, atol=1e-4, rtol=1e-4), "sequence mismatch"

    # --- bf16 path: half the HBM traffic, bf16-native MXU rate. Rounding error
    # compounds over the T recurrent steps, so only a loose sanity check applies.
    params_bf16 = prepare_params(w_in, b_in, w_rec, b_mod, compute_dtype=jnp.bfloat16)
    seq_bf16 = jax.block_until_ready(
        exprnn_sequence(xs, h, params_bf16, out_dtype=jnp.bfloat16))
    assert seq_bf16.shape == (seq_len, batch, hidden_size)
    seq_bf16_f32 = seq_bf16.astype(jnp.float32)
    assert bool(jnp.all(jnp.isfinite(seq_bf16_f32)))
    max_err = float(jnp.max(jnp.abs(seq_bf16_f32 - seq_ref)))
    assert max_err < 0.3, f"bf16 sequence grossly off (max abs err {max_err})"

    print("KERNEL_OK")
</pallas_src>

<mosaic_0001>
module attributes {stable_mosaic.version = 11 : i64} {
  func.func @_step_kernel(%arg0: i32, %arg1: memref<8x128xf32, #tpu.memory_space<vmem>>, %arg2: memref<8x128xf32, #tpu.memory_space<vmem>>, %arg3: memref<128x128xf32, #tpu.memory_space<vmem>>, %arg4: memref<128x128xf32, #tpu.memory_space<vmem>>, %arg5: memref<1x128xf32, #tpu.memory_space<vmem>>, %arg6: memref<1x128xf32, #tpu.memory_space<vmem>>, %arg7: memref<8x128xf32, #tpu.memory_space<vmem>>) attributes {dimension_semantics = [#tpu.dimension_semantics<parallel>], iteration_bounds = array<i64: 1>, scalar_prefetch = 0 : i64, scratch_operands = 0 : i64, tpu.core_type = #tpu.core_type<tc>, window_params = [{transform_indices = @transform_0, window_bounds = array<i64: 8, 128>}, {transform_indices = @transform_1, window_bounds = array<i64: 8, 128>}, {pipeline_mode = #tpu.pipeline_mode<synchronous>, transform_indices = @transform_2, window_bounds = array<i64: 128, 128>}, {pipeline_mode = #tpu.pipeline_mode<synchronous>, transform_indices = @transform_3, window_bounds = array<i64: 128, 128>}, {pipeline_mode = #tpu.pipeline_mode<synchronous>, transform_indices = @transform_4, window_bounds = array<i64: 1, 128>}, {pipeline_mode = #tpu.pipeline_mode<synchronous>, transform_indices = @transform_5, window_bounds = array<i64: 1, 128>}, {transform_indices = @transform_6, window_bounds = array<i64: 8, 128>}]} {
    %c0 = arith.constant 0 : index
    %c0_0 = arith.constant 0 : index
    %0 = vector.load %arg1[%c0, %c0_0] : memref<8x128xf32, #tpu.memory_space<vmem>>, vector<8x128xf32>
    %c0_1 = arith.constant 0 : index
    %c0_2 = arith.constant 0 : index
    %1 = vector.load %arg3[%c0_1, %c0_2] : memref<128x128xf32, #tpu.memory_space<vmem>>, vector<128x128xf32>
    %cst = arith.constant dense<0.000000e+00> : vector<8x128xf32>
    %2 = tpu.matmul %0, %1, %cst {dimension_numbers = #tpu.dot_dimension_numbers<[1], [0], [0], [1], [0, 0, 1, 1], [], []>} : vector<8x128xf32>, vector<128x128xf32>, vector<8x128xf32> -> vector<8x128xf32>
    %c0_3 = arith.constant 0 : index
    %c0_4 = arith.constant 0 : index
    %3 = vector.load %arg2[%c0_3, %c0_4] : memref<8x128xf32, #tpu.memory_space<vmem>>, vector<8x128xf32>
    %c0_5 = arith.constant 0 : index
    %c0_6 = arith.constant 0 : index
    %4 = vector.load %arg4[%c0_5, %c0_6] : memref<128x128xf32, #tpu.memory_space<vmem>>, vector<128x128xf32>
    %cst_7 = arith.constant dense<0.000000e+00> : vector<8x128xf32>
    %5 = tpu.matmul %3, %4, %cst_7 {dimension_numbers = #tpu.dot_dimension_numbers<[1], [0], [0], [1], [0, 0, 1, 1], [], []>} : vector<8x128xf32>, vector<128x128xf32>, vector<8x128xf32> -> vector<8x128xf32>
    %6 = arith.addf %2, %5 : vector<8x128xf32>
    %c0_8 = arith.constant 0 : index
    %c0_9 = arith.constant 0 : index
    %7 = vector.load %arg5[%c0_8, %c0_9] : memref<1x128xf32, #tpu.memory_space<vmem>>, vector<1x128xf32>
    %8 = vector.broadcast %7 : vector<1x128xf32> to vector<8x128xf32>
    %9 = arith.addf %6, %8 : vector<8x128xf32>
    %c0_10 = arith.constant 0 : index
    %c0_11 = arith.constant 0 : index
    %10 = vector.load %arg6[%c0_10, %c0_11] : memref<1x128xf32, #tpu.memory_space<vmem>>, vector<1x128xf32>
    %11 = math.absf %9 : vector<8x128xf32>
    %12 = vector.broadcast %10 : vector<1x128xf32> to vector<8x128xf32>
    %13 = arith.addf %11, %12 : vector<8x128xf32>
    %cst_12 = arith.constant 0.000000e+00 : f32
    %14 = vector.broadcast %cst_12 : f32 to vector<8x128xf32>
    %15 = arith.maximumf %13, %14 : vector<8x128xf32>
    %cst_13 = arith.constant 0.000000e+00 : f32
    %16 = vector.broadcast %cst_13 : f32 to vector<8x128xf32>
    %17 = arith.cmpf olt, %9, %16 : vector<8x128xf32>
    %cst_14 = arith.constant 0.000000e+00 : f32
    %18 = vector.broadcast %cst_14 : f32 to vector<8x128xf32>
    %19 = arith.subf %18, %15 : vector<8x128xf32>
    %20 = arith.select %17, %19, %15 : vector<8x128xi1>, vector<8x128xf32>
    %cst_15 = arith.constant 0.000000e+00 : f32
    %21 = vector.broadcast %cst_15 : f32 to vector<8x128xf32>
    %22 = arith.cmpf oeq, %9, %21 : vector<8x128xf32>
    %cst_16 = arith.constant 0.000000e+00 : f32
    %23 = vector.broadcast %cst_16 : f32 to vector<8x128xf32>
    %24 = arith.select %22, %23, %20 : vector<8x128xi1>, vector<8x128xf32>
    %c0_17 = arith.constant 0 : index
    %c0_18 = arith.constant 0 : index
    %25 = vector.load %arg7[%c0_17, %c0_18] : memref<8x128xf32, #tpu.memory_space<vmem>>, vector<8x128xf32>
    tpu.vector_store %arg7[%c0_17, %c0_18], %24 {strides = array<i32>} : memref<8x128xf32, #tpu.memory_space<vmem>>, vector<8x128xf32>,
    return
  }
  func.func @transform_0(%arg0: i32) -> (i32, i32) {
    %c0_i32 = arith.constant 0 : i32
    %c0_i32_0 = arith.constant 0 : i32
    return %arg0, %c0_i32 : i32, i32
  }
  func.func @transform_1(%arg0: i32) -> (i32, i32) {
    %c0_i32 = arith.constant 0 : i32
    %c0_i32_0 = arith.constant 0 : i32
    return %arg0, %c0_i32 : i32, i32
  }
  func.func @transform_2(%arg0: i32) -> (i32, i32) {
    %c0_i32 = arith.constant 0 : i32
    %c0_i32_0 = arith.constant 0 : i32
    %c0_i32_1 = arith.constant 0 : i32
    return %c0_i32, %c0_i32_0 : i32, i32
  }
  func.func @transform_3(%arg0: i32) -> (i32, i32) {
    %c0_i32 = arith.constant 0 : i32
    %c0_i32_0 = arith.constant 0 : i32
    %c0_i32_1 = arith.constant 0 : i32
    return %c0_i32, %c0_i32_0 : i32, i32
  }
  func.func @transform_4(%arg0: i32) -> (i32, i32) {
    %c0_i32 = arith.constant 0 : i32
    %c0_i32_0 = arith.constant 0 : i32
    %c0_i32_1 = arith.constant 0 : i32
    return %c0_i32, %c0_i32_0 : i32, i32
  }
  func.func @transform_5(%arg0: i32) -> (i32, i32) {
    %c0_i32 = arith.constant 0 : i32
    %c0_i32_0 = arith.constant 0 : i32
    %c0_i32_1 = arith.constant 0 : i32
    return %c0_i32, %c0_i32_0 : i32, i32
  }
  func.func @transform_6(%arg0: i32) -> (i32, i32) {
    %c0_i32 = arith.constant 0 : i32
    %c0_i32_0 = arith.constant 0 : i32
    return %arg0, %c0_i32 : i32, i32
  }
}

</mosaic_0001>

<llo_original>
// kernel: tpu_custom_call.1
$region0: #{tpu_custom_call.1}
  #allocation0 [shape = 'u32[]', space=smem, size = 0x4, offset = 0x4, fixed_abs, tag = 'smem constant byte address 0x4 - core index']
  #allocation1 [shape = 'u32[144,128]{1,0:T(1,128)}', space=vmem, size = 0x12000, scoped, tag = 'internal scratch']
  %s0 = inlined_call_operand.hbm [shape: f32[8,128], index: 0, kind: input, shape index: {}]
  %s1 = inlined_call_operand.hbm [shape: f32[8,128], index: 1, kind: input, shape index: {}]
  %s2 = inlined_call_operand.hbm [shape: f32[128,128], index: 2, kind: input, shape index: {}]
  %s3 = inlined_call_operand.hbm [shape: f32[128,128], index: 3, kind: input, shape index: {}]
  %s4 = inlined_call_operand.vmem [shape: f32[1,128], index: 4, kind: input, shape index: {}]
  %s5 = inlined_call_operand.vmem [shape: f32[1,128], index: 5, kind: input, shape index: {}]
  %s6 = inlined_call_operand.hbm [shape: f32[8,128], index: 6, kind: output, shape index: {}]
  %s7 = sld [smem:[#allocation0]]
  $region50: #{tpu_custom_call.1} parent=0
    _
  %s9 = ssub.s32 1, %s7
  %s10 = scalar_select 0, %s9, %s7
  $region1: #{tpu_custom_call.1} parent=0
    #allocation2 [shape = 'u8[4096]{0}', space=vmem, size = 0x1000, scoped, tag = 'input window, operand 0, single buffered']
    #allocation3 [shape = 's32[1]{0}', space=sflag, size = 0x4, scoped, tag = 'scoped memory for tpu_custom_call.1']
    #allocation4 [shape = 's32[1]{0}', space=sflag, size = 0x4, scoped, tag = 'scoped memory for tpu_custom_call.1']
    #allocation5 [shape = 'u8[4096]{0}', space=vmem, size = 0x1000, scoped, tag = 'input window, operand 1, single buffered']
    #allocation6 [shape = 's32[1]{0}', space=sflag, size = 0x4, scoped, tag = 'scoped memory for tpu_custom_call.1']
    #allocation7 [shape = 'u8[65536]{0}', space=vmem, size = 0x10000, scoped, tag = 'input window, operand 2, single buffered']
    #allocation8 [shape = 'u8[65536]{0}', space=vmem, size = 0x10000, scoped, tag = 'input window, operand 3, single buffered']
    #allocation9 [shape = 's32[1]{0}', space=sflag, size = 0x4, scoped, tag = 'scoped memory for tpu_custom_call.1']
    #allocation10 [shape = 'u8[4096]{0}', space=vmem, size = 0x1000, scoped, tag = 'output window, operand 0, single buffered']
    %11 = vsyncpa [#allocation3], 0
    %12 = vsyncpa [#allocation6], 0
    %13 = vsyncpa [#allocation9], 0
    %14 = vsyncpa [#allocation4], 0
    // Predicated region
    $region2: #{tpu_custom_call.1} parent=1 // pred_check
      _
    $region3: #{tpu_custom_call.1} parent=1 // pred_check_branch
      %16 = sbr.rel (0) target = $region5
    $region4: #{tpu_custom_call.1} parent=1 // pred_region
      %s18 = ssub.s32 128, 128
      %19 = vsyncadd [#allocation3], %s18
      %s21 = sshll.u32 [#allocation2], 4
      %s22 = int_to_ptr.vmem [resolvable:$true] %s21
      %24 = dma.hbm_to_vmem [thread:$0]  %s0, 128, %s22, [#allocation3]
    $region5: #{tpu_custom_call.1} parent=1 // pred_fallthru
      _
    // Predicated region
    $region6: #{tpu_custom_call.1} parent=1 // pred_check
      _
    $region7: #{tpu_custom_call.1} parent=1 // pred_check_branch
      %26 = sbr.rel (0) target = $region9
    $region8: #{tpu_custom_call.1} parent=1 // pred_region
      %s28 = ssub.s32 128, 128
      %29 = vsyncadd [#allocation6], %s28
      %s31 = sshll.u32 [#allocation5], 4
      %s32 = int_to_ptr.vmem [resolvable:$true] %s31
      %34 = dma.hbm_to_vmem [thread:$0]  %s1, 128, %s32, [#allocation6]
    $region9: #{tpu_custom_call.1} parent=1 // pred_fallthru
      _
    // Predicated region
    $region10: #{tpu_custom_call.1} parent=1 // pred_check
      _
    $region11: #{tpu_custom_call.1} parent=1 // pred_check_branch
      %36 = sbr.rel (0) target = $region13
    $region12: #{tpu_custom_call.1} parent=1 // pred_region
      %s38 = ssub.s32 2048, 2048
      %39 = vsyncadd [#allocation6], %s38
      %s40 = sshll.u32 [#allocation7], 4
      %s41 = int_to_ptr.vmem [resolvable:$true] %s40
      %46 = dma.hbm_to_vmem [thread:$0]  %s2, 2048, %s41, [#allocation6], 128, 128, 8
    $region13: #{tpu_custom_call.1} parent=1 // pred_fallthru
      _
    // Predicated region
    $region14: #{tpu_custom_call.1} parent=1 // pred_check
      _
    $region15: #{tpu_custom_call.1} parent=1 // pred_check_branch
      %48 = sbr.rel (0) target = $region17
    $region16: #{tpu_custom_call.1} parent=1 // pred_region
      %s50 = ssub.s32 2048, 2048
      %51 = vsyncadd [#allocation9], %s50
      %s52 = sshll.u32 [#allocation8], 4
      %s53 = int_to_ptr.vmem [resolvable:$true] %s52
      %58 = dma.hbm_to_vmem [thread:$0]  %s3, 2048, %s53, [#allocation9], 128, 128, 8
    $region17: #{tpu_custom_call.1} parent=1 // pred_fallthru
      _
    // Predicated region
    $region18: #{tpu_custom_call.1} parent=1 // pred_check
      _
    $region19: #{tpu_custom_call.1} parent=1 // pred_check_branch
      %60 = sbr.rel (0) target = $region21
    $region20: #{tpu_custom_call.1} parent=1 // pred_region
      _
    $region21: #{tpu_custom_call.1} parent=1 // pred_fallthru
      _
    // Predicated region
    $region22: #{tpu_custom_call.1} parent=1 // pred_check
      _
    $region23: #{tpu_custom_call.1} parent=1 // pred_check_branch
      %62 = sbr.rel (0) target = $region25
    $region24: #{tpu_custom_call.1} parent=1 // pred_region
      _
    $region25: #{tpu_custom_call.1} parent=1 // pred_fallthru
      _
    // Predicated region
    $region26: #{tpu_custom_call.1} parent=1 // pred_check
      _
    $region27: #{tpu_custom_call.1} parent=1 // pred_check_branch
      %64 = sbr.rel (0) target = $region29
    $region28: #{tpu_custom_call.1} parent=1 // pred_region
      %65 = dma.done [#allocation3], 128
    $region29: #{tpu_custom_call.1} parent=1 // pred_fallthru
      _
    // Predicated region
    $region30: #{tpu_custom_call.1} parent=1 // pred_check
      _
    $region31: #{tpu_custom_call.1} parent=1 // pred_check_branch
      %67 = sbr.rel (0) target = $region33
    $region32: #{tpu_custom_call.1} parent=1 // pred_region
      %68 = dma.done [#allocation6], 128
    $region33: #{tpu_custom_call.1} parent=1 // pred_fallthru
      _
    // Predicated region
    $region34: #{tpu_custom_call.1} parent=1 // pred_check
      _
    $region35: #{tpu_custom_call.1} parent=1 // pred_check_branch
      %70 = sbr.rel (0) target = $region37
    $region36: #{tpu_custom_call.1} parent=1 // pred_region
      %71 = dma.done [#allocation6], 2048
    $region37: #{tpu_custom_call.1} parent=1 // pred_fallthru
      _
    // Predicated region
    $region38: #{tpu_custom_call.1} parent=1 // pred_check
      _
    $region39: #{tpu_custom_call.1} parent=1 // pred_check_branch
      %73 = sbr.rel (0) target = $region41
    $region40: #{tpu_custom_call.1} parent=1 // pred_region
      %74 = dma.done [#allocation9], 2048
    $region41: #{tpu_custom_call.1} parent=1 // pred_fallthru
      _
    %v75 = vld [vmem:[#allocation2] sm:$0xff]
    %v76 = vld [vmem:[#allocation7] sm:$0xff]
    %v77 = vld [vmem:[#allocation7 + $0x8] sm:$0xff]
    %v78 = vld [vmem:[#allocation7 + $0x10] sm:$0xff]
    %v79 = vld [vmem:[#allocation7 + $0x18] sm:$0xff]
    %v80 = vld [vmem:[#allocation7 + $0x20] sm:$0xff]
    %v81 = vld [vmem:[#allocation7 + $0x28] sm:$0xff]
    %v82 = vld [vmem:[#allocation7 + $0x30] sm:$0xff]
    %v83 = vld [vmem:[#allocation7 + $0x38] sm:$0xff]
    %v84 = vld [vmem:[#allocation7 + $0x40] sm:$0xff]
    %v85 = vld [vmem:[#allocation7 + $0x48] sm:$0xff]
    %v86 = vld [vmem:[#allocation7 + $0x50] sm:$0xff]
    %v87 = vld [vmem:[#allocation7 + $0x58] sm:$0xff]
    %v88 = vld [vmem:[#allocation7 + $0x60] sm:$0xff]
    %v89 = vld [vmem:[#allocation7 + $0x68] sm:$0xff]
    %v90 = vld [vmem:[#allocation7 + $0x70] sm:$0xff]
    %v91 = vld [vmem:[#allocation7 + $0x78] sm:$0xff]
    %v92 = vld [vmem:[#allocation5] sm:$0xff]
    %v93 = vld [vmem:[#allocation8] sm:$0xff]
    %v94 = vld [vmem:[#allocation8 + $0x8] sm:$0xff]
    %v95 = vld [vmem:[#allocation8 + $0x10] sm:$0xff]
    %v96 = vld [vmem:[#allocation8 + $0x18] sm:$0xff]
    %v97 = vld [vmem:[#allocation8 + $0x20] sm:$0xff]
    %v98 = vld [vmem:[#allocation8 + $0x28] sm:$0xff]
    %v99 = vld [vmem:[#allocation8 + $0x30] sm:$0xff]
    %v100 = vld [vmem:[#allocation8 + $0x38] sm:$0xff]
    %v101 = vld [vmem:[#allocation8 + $0x40] sm:$0xff]
    %v102 = vld [vmem:[#allocation8 + $0x48] sm:$0xff]
    %v103 = vld [vmem:[#allocation8 + $0x50] sm:$0xff]
    %v104 = vld [vmem:[#allocation8 + $0x58] sm:$0xff]
    %v105 = vld [vmem:[#allocation8 + $0x60] sm:$0xff]
    %v106 = vld [vmem:[#allocation8 + $0x68] sm:$0xff]
    %v107 = vld [vmem:[#allocation8 + $0x70] sm:$0xff]
    %v108 = vld [vmem:[#allocation8 + $0x78] sm:$0xff]
    %109 = vmatprep.subr.mxu0 0.0
    %110 = vmatpush1.msra.mxu0 %v108
    %111 = vmatprep.subr.mxu0 0.0
    %112 = vmatpush1.msra.mxu0 %v107
    %113 = vmatprep.subr.mxu0 0.0
    %114 = vmatpush1.msra.mxu0 %v106
    %115 = vmatprep.subr.mxu0 0.0
    %116 = vmatpush1.msra.mxu0 %v105
    %117 = vmatprep.subr.mxu0 0.0
    %118 = vmatpush1.msra.mxu0 %v104
    %119 = vmatprep.subr.mxu0 0.0
    %120 = vmatpush1.msra.mxu0 %v103
    %121 = vmatprep.subr.mxu0 0.0
    %122 = vmatpush1.msra.mxu0 %v102
    %123 = vmatprep.subr.mxu0 0.0
    %124 = vmatpush1.msra.mxu0 %v101
    %125 = vmatprep.subr.mxu0 0.0
    %126 = vmatpush1.msra.mxu0 %v100
    %127 = vmatprep.subr.mxu0 0.0
    %128 = vmatpush1.msra.mxu0 %v99
    %129 = vmatprep.subr.mxu0 0.0
    %130 = vmatpush1.msra.mxu0 %v98
    %131 = vmatprep.subr.mxu0 0.0
    %132 = vmatpush1.msra.mxu0 %v97
    %133 = vmatprep.subr.mxu0 0.0
    %134 = vmatpush1.msra.mxu0 %v96
    %135 = vmatprep.subr.mxu0 0.0
    %136 = vmatpush1.msra.mxu0 %v95
    %137 = vmatprep.subr.mxu0 0.0
    %138 = vmatpush1.msra.mxu0 %v94
    %139 = vmatprep.subr.mxu0 0.0
    %140 = vmatpush1.msra.mxu0 %v93
    %141 = vmatprep.subr.mxu0 0.0
    %142 = vmatpush2.msra.mxu0 0.0
    %143 = vmatprep.subr.mxu0 0.0
    %144 = vmatpush2.msra.mxu0 0.0
    %145 = vmatprep.subr.mxu0 0.0
    %146 = vmatpush2.msra.mxu0 0.0
    %147 = vmatprep.subr.mxu0 0.0
    %148 = vmatpush2.msra.mxu0 0.0
    %149 = vmatprep.subr.mxu0 0.0
    %150 = vmatpush2.msra.mxu0 0.0
    %151 = vmatprep.subr.mxu0 0.0
    %152 = vmatpush2.msra.mxu0 0.0
    %153 = vmatprep.subr.mxu0 0.0
    %154 = vmatpush2.msra.mxu0 0.0
    %155 = vmatprep.subr.mxu0 0.0
    %156 = vmatpush2.msra.mxu0 0.0
    %157 = vmatprep.subr.mxu0 0.0
    %158 = vmatpush2.msra.mxu0 0.0
    %159 = vmatprep.subr.mxu0 0.0
    %160 = vmatpush2.msra.mxu0 0.0
    %161 = vmatprep.subr.mxu0 0.0
    %162 = vmatpush2.msra.mxu0 0.0
    %163 = vmatprep.subr.mxu0 0.0
    %164 = vmatpush2.msra.mxu0 0.0
    %165 = vmatprep.subr.mxu0 0.0
    %166 = vmatpush2.msra.mxu0 0.0
    %167 = vmatprep.subr.mxu0 0.0
    %168 = vmatpush2.msra.mxu0 0.0
    %169 = vmatprep.subr.mxu0 0.0
    %170 = vmatpush2.msra.mxu0 0.0
    %171 = vmatprep.subr.mxu0 0.0
    %172 = vmatpush2.msra.mxu0 0.0
    %173 = vmatprep.mubr.f32.mxu0 0.0
    %174 = vmatmul.mubr.f32.gmra.mxu0 %v92
    %v175 = vpop.f32.mrf.mxu0
    %v176 = vadd.f32 0.0, %v175
    %v177 = vpop.f32.mrf.mxu0
    %178 = vdwg.mxu0
    %179 = vmatprep.subr.mxu0 0.0
    %180 = vmatpush1.msra.mxu0 %v91
    %181 = vmatprep.subr.mxu0 0.0
    %182 = vmatpush1.msra.mxu0 %v90
    %183 = vmatprep.subr.mxu0 0.0
    %184 = vmatpush1.msra.mxu0 %v89
    %185 = vmatprep.subr.mxu0 0.0
    %186 = vmatpush1.msra.mxu0 %v88
    %187 = vmatprep.subr.mxu0 0.0
    %188 = vmatpush1.msra.mxu0 %v87
    %189 = vmatprep.subr.mxu0 0.0
    %190 = vmatpush1.msra.mxu0 %v86
    %191 = vmatprep.subr.mxu0 0.0
    %192 = vmatpush1.msra.mxu0 %v85
    %193 = vmatprep.subr.mxu0 0.0
    %194 = vmatpush1.msra.mxu0 %v84
    %195 = vmatprep.subr.mxu0 0.0
    %196 = vmatpush1.msra.mxu0 %v83
    %197 = vmatprep.subr.mxu0 0.0
    %198 = vmatpush1.msra.mxu0 %v82
    %199 = vmatprep.subr.mxu0 0.0
    %200 = vmatpush1.msra.mxu0 %v81
    %201 = vmatprep.subr.mxu0 0.0
    %202 = vmatpush1.msra.mxu0 %v80
    %203 = vmatprep.subr.mxu0 0.0
    %204 = vmatpush1.msra.mxu0 %v79
    %205 = vmatprep.subr.mxu0 0.0
    %206 = vmatpush1.msra.mxu0 %v78
    %207 = vmatprep.subr.mxu0 0.0
    %208 = vmatpush1.msra.mxu0 %v77
    %209 = vmatprep.subr.mxu0 0.0
    %210 = vmatpush1.msra.mxu0 %v76
    %211 = vmatprep.subr.mxu0 0.0
    %212 = vmatpush2.msra.mxu0 0.0
    %213 = vmatprep.subr.mxu0 0.0
    %214 = vmatpush2.msra.mxu0 0.0
    %215 = vmatprep.subr.mxu0 0.0
    %216 = vmatpush2.msra.mxu0 0.0
    %217 = vmatprep.subr.mxu0 0.0
    %218 = vmatpush2.msra.mxu0 0.0
    %219 = vmatprep.subr.mxu0 0.0
    %220 = vmatpush2.msra.mxu0 0.0
    %221 = vmatprep.subr.mxu0 0.0
    %222 = vmatpush2.msra.mxu0 0.0
    %223 = vmatprep.subr.mxu0 0.0
    %224 = vmatpush2.msra.mxu0 0.0
    %225 = vmatprep.subr.mxu0 0.0
    %226 = vmatpush2.msra.mxu0 0.0
    %227 = vmatprep.subr.mxu0 0.0
    %228 = vmatpush2.msra.mxu0 0.0
    %229 = vmatprep.subr.mxu0 0.0
    %230 = vmatpush2.msra.mxu0 0.0
    %231 = vmatprep.subr.mxu0 0.0
    %232 = vmatpush2.msra.mxu0 0.0
    %233 = vmatprep.subr.mxu0 0.0
    %234 = vmatpush2.msra.mxu0 0.0
    %235 = vmatprep.subr.mxu0 0.0
    %236 = vmatpush2.msra.mxu0 0.0
    %237 = vmatprep.subr.mxu0 0.0
    %238 = vmatpush2.msra.mxu0 0.0
    %239 = vmatprep.subr.mxu0 0.0
    %240 = vmatpush2.msra.mxu0 0.0
    %241 = vmatprep.subr.mxu0 0.0
    %242 = vmatpush2.msra.mxu0 0.0
    %243 = vmatprep.mubr.f32.mxu0 0.0
    %244 = vmatmul.mubr.f32.gmra.mxu0 %v75
    %v245 = vpop.f32.mrf.mxu0
    %v246 = vadd.f32 %v176, %v245
    %v247 = vpop.f32.mrf.mxu0
    %248 = vdwg.mxu0
    %v249 = vld [vmem:[%s4] sm:$0x1]
    %v251 = vlaneseq
    %v252 = vshrl.u32 %v251, 7
    %v253 = vsub.s32 0, %v252
    %v254 = vrot.slane %v249, %v253
    %v256 = vadd.f32 %v246, %v254
    %v257 = vld [vmem:[%s5] sm:$0x1]
    %v258 = vand.u32 2147483647, %v256
    %v260 = vlaneseq
    %v261 = vshrl.u32 %v260, 7
    %v262 = vsub.s32 0, %v261
    %v263 = vrot.slane %v257, %v262
    %v265 = vadd.f32 %v258, %v263
    %v266 = vmax.f32 %v265, 0.0
    %vm267 = vcmp.lt.f32.partialorder %v256, 0.0
    %v268 = vsub.f32 0.0, %v266
    %v269 = vsel %vm267, %v268, %v266
    %vm270 = vcmp.eq.f32.partialorder %v256, 0.0
    %v271 = vsel %vm270, 0.0, %v269
    %272 = vst [vmem:[#allocation10] sm:$0xff] %v271
    // Predicated region
    $region42: #{tpu_custom_call.1} parent=1 // pred_check
      _
    $region43: #{tpu_custom_call.1} parent=1 // pred_check_branch
      %274 = sbr.rel (0) target = $region45
    $region44: #{tpu_custom_call.1} parent=1 // pred_region
      %s276 = ssub.s32 128, 128
      %277 = vsyncadd [#allocation4], %s276
      %s279 = sshll.u32 [#allocation10], 4
      %s280 = int_to_ptr.vmem [resolvable:$true] %s279
      %282 = dma.vmem_to_hbm [thread:$0]  %s280, 128, %s6, [#allocation4]
    $region45: #{tpu_custom_call.1} parent=1 // pred_fallthru
      _
    // Predicated region
    $region46: #{tpu_custom_call.1} parent=1 // pred_check
      _
    $region47: #{tpu_custom_call.1} parent=1 // pred_check_branch
      %284 = sbr.rel (0) target = $region49
    $region48: #{tpu_custom_call.1} parent=1 // pred_region
      %285 = dma.done [#allocation4], 128
    $region49: #{tpu_custom_call.1} parent=1 // pred_fallthru
      _
    %286 = vsyncpa [#allocation3], 1
    %287 = vsyncpa [#allocation6], 1
    %288 = vsyncpa [#allocation9], 1
    %289 = vsyncpa [#allocation4], 1

</llo_original>
